<compile_context>
chip_gen: v5e
topology: v5e:2x2
jax: 0.10.0
libtpu: 0.0.40
codegen_flags: <defaults>
</compile_context>

<pallas_src>
import jax
import jax.numpy as jnp
from jax.experimental import pallas as pl
from jax.experimental.pallas import tpu as pltpu


def _round_up(a, b):
    return ((a + b - 1) // b) * b


def _vmem_capacity_bytes():
    try:
        return int(pltpu.get_tpu_info().vmem_capacity_bytes)
    except Exception:
        return 64 * 1024 * 1024  # conservative fallback (v7x per-TC VMEM)


def residual_mlp_kernel(x_ref, w1_ref, b1_ref, w2_ref, b2_ref, o_ref):
    # x_ref: (TM, Hp) f32   w1_ref/w2_ref: (Hp, Hp) bf16   b*_ref: (1, Hp) f32
    x = x_ref[...]                                          # f32, kept for residual
    h = jnp.dot(x.astype(jnp.bfloat16), w1_ref[...],
                preferred_element_type=jnp.float32)         # MXU, f32 accumulation
    h = jnp.maximum(h + b1_ref[...], 0.0)                   # bias + ReLU in f32
    y = jnp.dot(h.astype(jnp.bfloat16), w2_ref[...],
                preferred_element_type=jnp.float32)         # MXU, f32 accumulation
    o_ref[...] = (x + y + b2_ref[...]).astype(o_ref.dtype)  # residual add in f32


def prepare_params(w1, b1, w2, b2):
    """One-time prep (hoisted out of the per-call path): pad to lane-dense
    Hp = multiple of 128 and cast weights to bf16.  w1/w2 are (in, out)."""
    H = w1.shape[0]
    Hp = _round_up(max(H, 128), 128)
    pw = ((0, Hp - H), (0, Hp - H))
    w1p = jnp.pad(w1.astype(jnp.bfloat16), pw)
    w2p = jnp.pad(w2.astype(jnp.bfloat16), pw)
    b1p = jnp.pad(b1.astype(jnp.float32), (0, Hp - H)).reshape(1, Hp)
    b2p = jnp.pad(b2.astype(jnp.float32), (0, Hp - H)).reshape(1, Hp)
    return (w1p, b1p, w2p, b2p, H, Hp)


def _residual_block_impl(x, params, out_dtype, single_buffer_weights):
    w1p, b1p, w2p, b2p, H, Hp = params
    assert x.shape[-1] == H
    lead = x.shape[:-1]
    out_dtype = x.dtype if out_dtype is None else jnp.dtype(out_dtype)

    xr = x.reshape(-1, H).astype(jnp.float32)       # f32 residual path
    R = xr.shape[0]
    if Hp != H:
        # Lane-only zero pad (keeps contraction dim clean); rows are NOT padded.
        xr = jnp.pad(xr, ((0, 0), (0, Hp - H)))

    # ---- generation-aware VMEM budgeting -----------------------------------
    out_isz = jnp.dtype(out_dtype).itemsize
    nbuf_w = 1 if single_buffer_weights else 2
    weight_bytes = nbuf_w * (2 * Hp * Hp * 2 + 2 * Hp * 4)   # w1,w2 bf16 + biases f32
    vmem_cap = _vmem_capacity_bytes()
    stream_budget = max(int(vmem_cap * 0.75) - weight_bytes, 2 * 1024 * 1024)
    per_row_bytes = Hp * (4 + out_isz) * 2                   # x + o tiles, double-buffered
    tm_vmem = max(8, (stream_budget // per_row_bytes) // 8 * 8)

    TM = min(1024, tm_vmem, _round_up(R, 8))
    if R > 8:
        # >= 2 grid steps so both v7x TensorCores get work on the parallel axis.
        TM = min(TM, _round_up(pl.cdiv(R, 2), 8))
    TM = max(TM, 8)
    grid = (pl.cdiv(R, TM),)                                  # ragged last tile is clipped

    vmem_limit = int(min(vmem_cap,
                         weight_bytes + TM * per_row_bytes + (8 << 20)))

    if single_buffer_weights:
        def const_spec(shape):
            return pl.BlockSpec(shape, lambda i: (0, 0),
                                pipeline_mode=pl.Buffered(1))
    else:
        def const_spec(shape):
            return pl.BlockSpec(shape, lambda i: (0, 0))

    out = pl.pallas_call(
        residual_mlp_kernel,
        out_shape=jax.ShapeDtypeStruct((R, Hp), out_dtype),
        grid=grid,
        in_specs=[
            pl.BlockSpec((TM, Hp), lambda i: (i, 0)),   # x  : streamed row tiles
            const_spec((Hp, Hp)),                       # w1 : VMEM-resident
            const_spec((1, Hp)),                        # b1 : VMEM-resident
            const_spec((Hp, Hp)),                       # w2 : VMEM-resident
            const_spec((1, Hp)),                        # b2 : VMEM-resident
        ],
        out_specs=pl.BlockSpec((TM, Hp), lambda i: (i, 0)),
        compiler_params=pltpu.CompilerParams(
            dimension_semantics=("parallel",),
            vmem_limit_bytes=vmem_limit),
    )(xr, w1p, b1p, w2p, b2p)

    if Hp != H:
        out = out[:, :H]
    return out.reshape(*lead, H)


def residual_block(x, params, out_dtype=None):
    """y = x + Linear2(ReLU(Linear1(x))).  `params` from prepare_params()."""
    try:
        return _residual_block_impl(x, params, out_dtype, single_buffer_weights=True)
    except Exception:
        # Fallback for jax versions without per-operand pipeline_mode support.
        return _residual_block_impl(x, params, out_dtype, single_buffer_weights=False)


if __name__ == "__main__":
    B, S, H = 2, 8, 32   # batch, seq, hidden

    key = jax.random.PRNGKey(0)
    kx, kw1, kb1, kw2, kb2 = jax.random.split(key, 5)

    x = jax.random.normal(kx, (B, S, H), dtype=jnp.float32)

    # Deterministic parameter init (PyTorch Linear weight is (out, in);
    # we generate (in, out) directly since the kernel does x @ W).
    bound = 1.0 / (H ** 0.5)
    w1 = jax.random.uniform(kw1, (H, H), jnp.float32, -bound, bound)
    b1 = jax.random.uniform(kb1, (H,), jnp.float32, -bound, bound)
    w2 = jax.random.uniform(kw2, (H, H), jnp.float32, -bound, bound)
    b2 = jax.random.uniform(kb2, (H,), jnp.float32, -bound, bound)

    params = prepare_params(w1, b1, w2, b2)   # pad/cast once, reused per call
    y = residual_block(x, params)
    jax.block_until_ready(y)

    # Reference with matching mixed precision (bf16 matmul operands, f32 accum).
    xr = x.reshape(-1, H)
    h_ref = jnp.maximum(
        jnp.dot(xr.astype(jnp.bfloat16), w1.astype(jnp.bfloat16),
                preferred_element_type=jnp.float32) + b1, 0.0)
    y_ref = (xr + jnp.dot(h_ref.astype(jnp.bfloat16), w2.astype(jnp.bfloat16),
                          preferred_element_type=jnp.float32) + b2).reshape(B, S, H)
    assert jnp.allclose(y, y_ref, atol=1e-4, rtol=1e-4), \
        float(jnp.max(jnp.abs(y - y_ref)))

    # Pure-f32 ResidualBlock semantics check (looser tol due to bf16 matmuls).
    h32 = jnp.maximum(x @ w1 + b1, 0.0)
    y32 = x + (h32 @ w2 + b2)
    assert jnp.allclose(y, y32, atol=5e-2, rtol=5e-2), \
        float(jnp.max(jnp.abs(y - y32)))

    print("KERNEL_OK")
</pallas_src>

<mosaic_0001>
module attributes {stable_mosaic.version = 11 : i64} {
  func.func @residual_mlp_kernel(%arg0: i32, %arg1: memref<8x128xf32, #tpu.memory_space<vmem>>, %arg2: memref<128x128xbf16, #tpu.memory_space<vmem>>, %arg3: memref<1x128xf32, #tpu.memory_space<vmem>>, %arg4: memref<128x128xbf16, #tpu.memory_space<vmem>>, %arg5: memref<1x128xf32, #tpu.memory_space<vmem>>, %arg6: memref<8x128xf32, #tpu.memory_space<vmem>>) attributes {dimension_semantics = [#tpu.dimension_semantics<parallel>], iteration_bounds = array<i64: 2>, scalar_prefetch = 0 : i64, scratch_operands = 0 : i64, tpu.core_type = #tpu.core_type<tc>, window_params = [{transform_indices = @transform_0, window_bounds = array<i64: 8, 128>}, {pipeline_mode = #tpu.pipeline_mode<synchronous>, transform_indices = @transform_1, window_bounds = array<i64: 128, 128>}, {pipeline_mode = #tpu.pipeline_mode<synchronous>, transform_indices = @transform_2, window_bounds = array<i64: 1, 128>}, {pipeline_mode = #tpu.pipeline_mode<synchronous>, transform_indices = @transform_3, window_bounds = array<i64: 128, 128>}, {pipeline_mode = #tpu.pipeline_mode<synchronous>, transform_indices = @transform_4, window_bounds = array<i64: 1, 128>}, {transform_indices = @transform_5, window_bounds = array<i64: 8, 128>}]} {
    %c0 = arith.constant 0 : index
    %c0_0 = arith.constant 0 : index
    %0 = vector.load %arg1[%c0, %c0_0] : memref<8x128xf32, #tpu.memory_space<vmem>>, vector<8x128xf32>
    %1 = arith.truncf %0 : vector<8x128xf32> to vector<8x128xbf16>
    %c0_1 = arith.constant 0 : index
    %c0_2 = arith.constant 0 : index
    %2 = vector.load %arg2[%c0_1, %c0_2] : memref<128x128xbf16, #tpu.memory_space<vmem>>, vector<128x128xbf16>
    %cst = arith.constant dense<0.000000e+00> : vector<8x128xf32>
    %3 = tpu.matmul %1, %2, %cst {dimension_numbers = #tpu.dot_dimension_numbers<[1], [0], [0], [1], [0, 0, 1, 1], [], []>} : vector<8x128xbf16>, vector<128x128xbf16>, vector<8x128xf32> -> vector<8x128xf32>
    %c0_3 = arith.constant 0 : index
    %c0_4 = arith.constant 0 : index
    %4 = vector.load %arg3[%c0_3, %c0_4] : memref<1x128xf32, #tpu.memory_space<vmem>>, vector<1x128xf32>
    %5 = vector.broadcast %4 : vector<1x128xf32> to vector<8x128xf32>
    %6 = arith.addf %3, %5 : vector<8x128xf32>
    %cst_5 = arith.constant 0.000000e+00 : f32
    %7 = vector.broadcast %cst_5 : f32 to vector<8x128xf32>
    %8 = arith.maximumf %6, %7 : vector<8x128xf32>
    %9 = arith.truncf %8 : vector<8x128xf32> to vector<8x128xbf16>
    %c0_6 = arith.constant 0 : index
    %c0_7 = arith.constant 0 : index
    %10 = vector.load %arg4[%c0_6, %c0_7] : memref<128x128xbf16, #tpu.memory_space<vmem>>, vector<128x128xbf16>
    %cst_8 = arith.constant dense<0.000000e+00> : vector<8x128xf32>
    %11 = tpu.matmul %9, %10, %cst_8 {dimension_numbers = #tpu.dot_dimension_numbers<[1], [0], [0], [1], [0, 0, 1, 1], [], []>} : vector<8x128xbf16>, vector<128x128xbf16>, vector<8x128xf32> -> vector<8x128xf32>
    %12 = arith.addf %0, %11 : vector<8x128xf32>
    %c0_9 = arith.constant 0 : index
    %c0_10 = arith.constant 0 : index
    %13 = vector.load %arg5[%c0_9, %c0_10] : memref<1x128xf32, #tpu.memory_space<vmem>>, vector<1x128xf32>
    %14 = vector.broadcast %13 : vector<1x128xf32> to vector<8x128xf32>
    %15 = arith.addf %12, %14 : vector<8x128xf32>
    %c0_11 = arith.constant 0 : index
    %c0_12 = arith.constant 0 : index
    %16 = vector.load %arg6[%c0_11, %c0_12] : memref<8x128xf32, #tpu.memory_space<vmem>>, vector<8x128xf32>
    tpu.vector_store %arg6[%c0_11, %c0_12], %15 {strides = array<i32>} : memref<8x128xf32, #tpu.memory_space<vmem>>, vector<8x128xf32>,
    return
  }
  func.func @transform_0(%arg0: i32) -> (i32, i32) {
    %c0_i32 = arith.constant 0 : i32
    %c0_i32_0 = arith.constant 0 : i32
    return %arg0, %c0_i32 : i32, i32
  }
  func.func @transform_1(%arg0: i32) -> (i32, i32) {
    %c0_i32 = arith.constant 0 : i32
    %c0_i32_0 = arith.constant 0 : i32
    %c0_i32_1 = arith.constant 0 : i32
    return %c0_i32, %c0_i32_0 : i32, i32
  }
  func.func @transform_2(%arg0: i32) -> (i32, i32) {
    %c0_i32 = arith.constant 0 : i32
    %c0_i32_0 = arith.constant 0 : i32
    %c0_i32_1 = arith.constant 0 : i32
    return %c0_i32, %c0_i32_0 : i32, i32
  }
  func.func @transform_3(%arg0: i32) -> (i32, i32) {
    %c0_i32 = arith.constant 0 : i32
    %c0_i32_0 = arith.constant 0 : i32
    %c0_i32_1 = arith.constant 0 : i32
    return %c0_i32, %c0_i32_0 : i32, i32
  }
  func.func @transform_4(%arg0: i32) -> (i32, i32) {
    %c0_i32 = arith.constant 0 : i32
    %c0_i32_0 = arith.constant 0 : i32
    %c0_i32_1 = arith.constant 0 : i32
    return %c0_i32, %c0_i32_0 : i32, i32
  }
  func.func @transform_5(%arg0: i32) -> (i32, i32) {
    %c0_i32 = arith.constant 0 : i32
    %c0_i32_0 = arith.constant 0 : i32
    return %arg0, %c0_i32 : i32, i32
  }
}

module attributes {stable_mosaic.version = 11 : i64} {
  func.func @residual_mlp_kernel(%arg0: i32, %arg1: memref<8x128xf32, #tpu.memory_space<vmem>>, %arg2: memref<128x128xbf16, #tpu.memory_space<vmem>>, %arg3: memref<1x128xf32, #tpu.memory_space<vmem>>, %arg4: memref<128x128xbf16, #tpu.memory_space<vmem>>, %arg5: memref<1x128xf32, #tpu.memory_space<vmem>>, %arg6: memref<8x128xf32, #tpu.memory_space<vmem>>) attributes {dimension_semantics = [#tpu.dimension_semantics<parallel>], iteration_bounds = array<i64: 2>, scalar_prefetch = 0 : i64, scratch_operands = 0 : i64, tpu.core_type = #tpu.core_type<tc>, window_params = [{transform_indices = @transform_0, window_bounds = array<i64: 8, 128>}, {pipeline_mode = #tpu.pipeline_mode<synchronous>, transform_indices = @transform_1, window_bounds = array<i64: 128, 128>}, {pipeline_mode = #tpu.pipeline_mode<synchronous>, transform_indices = @transform_2, window_bounds = array<i64: 1, 128>}, {pipeline_mode = #tpu.pipeline_mode<synchronous>, transform_indices = @transform_3, window_bounds = array<i64: 128, 128>}, {pipeline_mode = #tpu.pipeline_mode<synchronous>, transform_indices = @transform_4, window_bounds = array<i64: 1, 128>}, {transform_indices = @transform_5, window_bounds = array<i64: 8, 128>}]} {
    %c0 = arith.constant 0 : index
    %c0_0 = arith.constant 0 : index
    %0 = vector.load %arg1[%c0, %c0_0] : memref<8x128xf32, #tpu.memory_space<vmem>>, vector<8x128xf32>
    %1 = arith.truncf %0 : vector<8x128xf32> to vector<8x128xbf16>
    %c0_1 = arith.constant 0 : index
    %c0_2 = arith.constant 0 : index
    %2 = vector.load %arg2[%c0_1, %c0_2] : memref<128x128xbf16, #tpu.memory_space<vmem>>, vector<128x128xbf16>
    %cst = arith.constant dense<0.000000e+00> : vector<8x128xf32>
    %3 = tpu.matmul %1, %2, %cst {dimension_numbers = #tpu.dot_dimension_numbers<[1], [0], [0], [1], [0, 0, 1, 1], [], []>} : vector<8x128xbf16>, vector<128x128xbf16>, vector<8x128xf32> -> vector<8x128xf32>
    %c0_3 = arith.constant 0 : index
    %c0_4 = arith.constant 0 : index
    %4 = vector.load %arg3[%c0_3, %c0_4] : memref<1x128xf32, #tpu.memory_space<vmem>>, vector<1x128xf32>
    %5 = vector.broadcast %4 : vector<1x128xf32> to vector<8x128xf32>
    %6 = arith.addf %3, %5 : vector<8x128xf32>
    %cst_5 = arith.constant 0.000000e+00 : f32
    %7 = vector.broadcast %cst_5 : f32 to vector<8x128xf32>
    %8 = arith.maximumf %6, %7 : vector<8x128xf32>
    %9 = arith.truncf %8 : vector<8x128xf32> to vector<8x128xbf16>
    %c0_6 = arith.constant 0 : index
    %c0_7 = arith.constant 0 : index
    %10 = vector.load %arg4[%c0_6, %c0_7] : memref<128x128xbf16, #tpu.memory_space<vmem>>, vector<128x128xbf16>
    %cst_8 = arith.constant dense<0.000000e+00> : vector<8x128xf32>
    %11 = tpu.matmul %9, %10, %cst_8 {dimension_numbers = #tpu.dot_dimension_numbers<[1], [0], [0], [1], [0, 0, 1, 1], [], []>} : vector<8x128xbf16>, vector<128x128xbf16>, vector<8x128xf32> -> vector<8x128xf32>
    %12 = arith.addf %0, %11 : vector<8x128xf32>
    %c0_9 = arith.constant 0 : index
    %c0_10 = arith.constant 0 : index
    %13 = vector.load %arg5[%c0_9, %c0_10] : memref<1x128xf32, #tpu.memory_space<vmem>>, vector<1x128xf32>
    %14 = vector.broadcast %13 : vector<1x128xf32> to vector<8x128xf32>
    %15 = arith.addf %12, %14 : vector<8x128xf32>
    %c0_11 = arith.constant 0 : index
    %c0_12 = arith.constant 0 : index
    %16 = vector.load %arg6[%c0_11, %c0_12] : memref<8x128xf32, #tpu.memory_space<vmem>>, vector<8x128xf32>
    tpu.vector_store %arg6[%c0_11, %c0_12], %15 {strides = array<i32>} : memref<8x128xf32, #tpu.memory_space<vmem>>, vector<8x128xf32>,
    return
  }
  func.func @transform_0(%arg0: i32) -> (i32, i32) {
    %c0_i32 = arith.constant 0 : i32
    %c0_i32_0 = arith.constant 0 : i32
    return %arg0, %c0_i32 : i32, i32
  }
  func.func @transform_1(%arg0: i32) -> (i32, i32) {
    %c0_i32 = arith.constant 0 : i32
    %c0_i32_0 = arith.constant 0 : i32
    %c0_i32_1 = arith.constant 0 : i32
    return %c0_i32, %c0_i32_0 : i32, i32
  }
  func.func @transform_2(%arg0: i32) -> (i32, i32) {
    %c0_i32 = arith.constant 0 : i32
    %c0_i32_0 = arith.constant 0 : i32
    %c0_i32_1 = arith.constant 0 : i32
    return %c0_i32, %c0_i32_0 : i32, i32
  }
  func.func @transform_3(%arg0: i32) -> (i32, i32) {
    %c0_i32 = arith.constant 0 : i32
    %c0_i32_0 = arith.constant 0 : i32
    %c0_i32_1 = arith.constant 0 : i32
    return %c0_i32, %c0_i32_0 : i32, i32
  }
  func.func @transform_4(%arg0: i32) -> (i32, i32) {
    %c0_i32 = arith.constant 0 : i32
    %c0_i32_0 = arith.constant 0 : i32
    %c0_i32_1 = arith.constant 0 : i32
    return %c0_i32, %c0_i32_0 : i32, i32
  }
  func.func @transform_5(%arg0: i32) -> (i32, i32) {
    %c0_i32 = arith.constant 0 : i32
    %c0_i32_0 = arith.constant 0 : i32
    return %arg0, %c0_i32 : i32, i32
  }
}

</mosaic_0001>

<llo_original>
// kernel: tpu_custom_call.1
$region0: #{tpu_custom_call.1}
  #allocation0 [shape = 'u32[]', space=smem, size = 0x4, offset = 0x4, fixed_abs, tag = 'smem constant byte address 0x4 - core index']
  #allocation1 [shape = 'u32[72,128]{1,0:T(1,128)}', space=vmem, size = 0x9000, scoped, tag = 'internal scratch']
  %s0 = inlined_call_operand.hbm [shape: f32[16,128], index: 0, kind: input, shape index: {}]
  %s1 = inlined_call_operand.hbm [shape: bf16[128,128], index: 1, kind: input, shape index: {}]
  %s2 = inlined_call_operand.vmem [shape: f32[1,128], index: 2, kind: input, shape index: {}]
  %s3 = inlined_call_operand.hbm [shape: bf16[128,128], index: 3, kind: input, shape index: {}]
  %s4 = inlined_call_operand.vmem [shape: f32[1,128], index: 4, kind: input, shape index: {}]
  %s5 = inlined_call_operand.hbm [shape: f32[16,128], index: 5, kind: output, shape index: {}]
  %s6 = sld [smem:[#allocation0]]
  $region65: #{tpu_custom_call.1} parent=0
    _
  %s8 = ssub.s32 1, %s6
  %s9 = scalar_select 0, %s8, %s6
  $region1: #{tpu_custom_call.1} parent=0
    #allocation2 [shape = 'u8[8192]{0}', space=vmem, size = 0x2000, scoped, tag = 'input window, operand 0']
    #allocation3 [shape = 's32[2]{0}', space=sflag, size = 0x8, scoped, tag = 'scoped memory for tpu_custom_call.1']
    #allocation4 [shape = 's32[2]{0}', space=sflag, size = 0x8, scoped, tag = 'scoped memory for tpu_custom_call.1']
    #allocation5 [shape = 'u8[32768]{0}', space=vmem, size = 0x8000, scoped, tag = 'input window, operand 1, single buffered']
    #allocation6 [shape = 's32[1]{0}', space=sflag, size = 0x4, scoped, tag = 'scoped memory for tpu_custom_call.1']
    #allocation7 [shape = 'u8[32768]{0}', space=vmem, size = 0x8000, scoped, tag = 'input window, operand 3, single buffered']
    #allocation8 [shape = 'u8[8192]{0}', space=vmem, size = 0x2000, scoped, tag = 'output window, operand 0']
    %10 = vsyncpa [#allocation3], 0
    %s11 = scalar_lea.sflag [#allocation3], 1
    %12 = vsyncpa %s11, 0
    %13 = vsyncpa [#allocation6], 0
    %14 = vsyncpa [#allocation4], 0
    %s15 = scalar_lea.sflag [#allocation4], 1
    %16 = vsyncpa %s15, 0
    loop: start=0, step=1, limit=4
    $region2: #{tpu_custom_call.1} parent=1 // loop_pre_header
      _
    $region3: #{tpu_custom_call.1} parent=1 // loop_header
      %s18 = sphi 0, %s22
      %p19 = scmp.ge.s32.totalorder %s18, 4
      %s28 = sphi 0, %s30
      %s31 = sphi 0, %s28
      %s32 = sphi 0, %s31
      %s48 = sphi 0, %s32
      %s52 = sphi 0, %s52
      %s54 = sphi 0, %s52
      %s55 = sphi 0, %s54
      %s69 = sphi 0, %s55
      %s73 = sphi 0, %s73
      %s75 = sphi 0, %s73
      %s76 = sphi 0, %s75
      %s90 = sphi 0, %s76
      %s94 = sphi 0, %s94
      %s96 = sphi 0, %s94
      %s97 = sphi 0, %s96
      %s111 = sphi 0, %s97
      %s115 = sphi 0, %s115
      %s117 = sphi 0, %s115
      %s118 = sphi 0, %s117
      %s132 = sphi 0, %s118
      %s138 = sphi 0, %s140
      %s141 = sphi 0, %s138
      %s142 = sphi 0, %s141
      %s158 = sphi 0, %s142
    $region4: #{tpu_custom_call.1} parent=1 // loop_header_branch
      %21 = sbr.rel (%p19) target = $region8
    $region5: #{tpu_custom_call.1} parent=1 // loop_body
      %s23 = ssub.s32 %s18, 1
      %s24 = ssub.s32 %s18, 2
      %s25 = sadd.s32 %s18, 1
      %s26 = ssub.s32 %s18, %s25
      %p27 = scmp.eq.s32.totalorder %s26, 0
      %s29 = sadd.s32 %s28, 1
      %s30 = scalar_select %p27, %s28, %s29
      %p33 = pneg %p27
      %p34 = scmp.eq.s32.totalorder %s18, 1
      %p35 = por %p33, %p34
      %p36 = scmp.ne.s32.totalorder %s28, %s31
      %p37 = scmp.eq.s32.totalorder %s18, 0
      %p38 = por %p36, %p37
      %p39 = scmp.ne.s32.totalorder %s28, %s31
      %p40 = scmp.eq.s32.totalorder %s23, 1
      %p41 = por %p39, %p40
      %p42 = scmp.ne.s32.totalorder %s31, %s32
      %p43 = scmp.eq.s32.totalorder %s23, 0
      %p44 = por %p42, %p43
      %p45 = scmp.ne.s32.totalorder %s31, %s32
      %p46 = scmp.eq.s32.totalorder %s24, 1
      %p47 = por %p45, %p46
      %p49 = scmp.ne.s32.totalorder %s32, %s48
      %p50 = scmp.eq.s32.totalorder %s24, 0
      %p51 = por %p49, %p50
      %s53 = sadd.s32 %s52, 1
      %p56 = scmp.eq.s32.totalorder %s18, 1
      %p57 = scmp.ne.s32.totalorder %s52, %s54
      %p58 = scmp.eq.s32.totalorder %s18, 0
      %p59 = por %p57, %p58
      %p60 = scmp.ne.s32.totalorder %s52, %s54
      %p61 = scmp.eq.s32.totalorder %s23, 1
      %p62 = por %p60, %p61
      %p63 = scmp.ne.s32.totalorder %s54, %s55
      %p64 = scmp.eq.s32.totalorder %s23, 0
      %p65 = por %p63, %p64
      %p66 = scmp.ne.s32.totalorder %s54, %s55
      %p67 = scmp.eq.s32.totalorder %s24, 1
      %p68 = por %p66, %p67
      %p70 = scmp.ne.s32.totalorder %s55, %s69
      %p71 = scmp.eq.s32.totalorder %s24, 0
      %p72 = por %p70, %p71
      %s74 = sadd.s32 %s73, 1
      %p77 = scmp.eq.s32.totalorder %s18, 1
      %p78 = scmp.ne.s32.totalorder %s73, %s75
      %p79 = scmp.eq.s32.totalorder %s18, 0
      %p80 = por %p78, %p79
      %p81 = scmp.ne.s32.totalorder %s73, %s75
      %p82 = scmp.eq.s32.totalorder %s23, 1
      %p83 = por %p81, %p82
      %p84 = scmp.ne.s32.totalorder %s75, %s76
      %p85 = scmp.eq.s32.totalorder %s23, 0
      %p86 = por %p84, %p85
      %p87 = scmp.ne.s32.totalorder %s75, %s76
      %p88 = scmp.eq.s32.totalorder %s24, 1
      %p89 = por %p87, %p88
      %p91 = scmp.ne.s32.totalorder %s76, %s90
      %p92 = scmp.eq.s32.totalorder %s24, 0
      %p93 = por %p91, %p92
      %s95 = sadd.s32 %s94, 1
      %p98 = scmp.eq.s32.totalorder %s18, 1
      %p99 = scmp.ne.s32.totalorder %s94, %s96
      %p100 = scmp.eq.s32.totalorder %s18, 0
      %p101 = por %p99, %p100
      %p102 = scmp.ne.s32.totalorder %s94, %s96
      %p103 = scmp.eq.s32.totalorder %s23, 1
      %p104 = por %p102, %p103
      %p105 = scmp.ne.s32.totalorder %s96, %s97
      %p106 = scmp.eq.s32.totalorder %s23, 0
      %p107 = por %p105, %p106
      %p108 = scmp.ne.s32.totalorder %s96, %s97
      %p109 = scmp.eq.s32.totalorder %s24, 1
      %p110 = por %p108, %p109
      %p112 = scmp.ne.s32.totalorder %s97, %s111
      %p113 = scmp.eq.s32.totalorder %s24, 0
      %p114 = por %p112, %p113
      %s116 = sadd.s32 %s115, 1
      %p119 = scmp.eq.s32.totalorder %s18, 1
      %p120 = scmp.ne.s32.totalorder %s115, %s117
      %p121 = scmp.eq.s32.totalorder %s18, 0
      %p122 = por %p120, %p121
      %p123 = scmp.ne.s32.totalorder %s115, %s117
      %p124 = scmp.eq.s32.totalorder %s23, 1
      %p125 = por %p123, %p124
      %p126 = scmp.ne.s32.totalorder %s117, %s118
      %p127 = scmp.eq.s32.totalorder %s23, 0
      %p128 = por %p126, %p127
      %p129 = scmp.ne.s32.totalorder %s117, %s118
      %p130 = scmp.eq.s32.totalorder %s24, 1
      %p131 = por %p129, %p130
      %p133 = scmp.ne.s32.totalorder %s118, %s132
      %p134 = scmp.eq.s32.totalorder %s24, 0
      %p135 = por %p133, %p134
      %s136 = ssub.s32 %s18, %s25
      %p137 = scmp.eq.s32.totalorder %s136, 0
      %s139 = sadd.s32 %s138, 1
      %s140 = scalar_select %p137, %s138, %s139
      %p143 = pneg %p137
      %p144 = scmp.eq.s32.totalorder %s18, 1
      %p145 = por %p143, %p144
      %p146 = scmp.ne.s32.totalorder %s138, %s141
      %p147 = scmp.eq.s32.totalorder %s18, 0
      %p148 = por %p146, %p147
      %p149 = scmp.ne.s32.totalorder %s138, %s141
      %p150 = scmp.eq.s32.totalorder %s23, 1
      %p151 = por %p149, %p150
      %p152 = scmp.ne.s32.totalorder %s141, %s142
      %p153 = scmp.eq.s32.totalorder %s23, 0
      %p154 = por %p152, %p153
      %p155 = scmp.ne.s32.totalorder %s141, %s142
      %p156 = scmp.eq.s32.totalorder %s24, 1
      %p157 = por %p155, %p156
      %p159 = scmp.ne.s32.totalorder %s142, %s158
      %p160 = scmp.eq.s32.totalorder %s24, 0
      %p161 = por %p159, %p160
      %p162 = scmp.le.s32.totalorder 1, %s18
      %p163 = scmp.lt.s32.totalorder %s18, 3
      %p164 = pnand %p162, %p163
      %p165 = pneg %p164
      // Predicated region
      $region9: #{tpu_custom_call.1} parent=5 // pred_check
        _
      $region10: #{tpu_custom_call.1} parent=5 // pred_check_branch
        %167 = sbr.rel (%p164) target = $region12
      $region11: #{tpu_custom_call.1} parent=5 // pred_region
        %s168 = ssub.s32 %s18, 1
        // Predicated region
        $region13: #{tpu_custom_call.1} parent=11 // pred_check
          %p169 = pneg %p65
        $region14: #{tpu_custom_call.1} parent=11 // pred_check_branch
          %171 = sbr.rel (%p169) target = $region16
        $region15: #{tpu_custom_call.1} parent=11 // pred_region
          %173 = vsyncadd [#allocation6], 0
          %s174 = sshll.u32 %s1, 4
          %s175 = int_to_ptr.hbm [resolvable:$true] %s174
          %s176 = sshll.u32 [#allocation5], 4
          %s177 = int_to_ptr.vmem [resolvable:$true] %s176
          %182 = dma.hbm_to_vmem [thread:$0]  %s175, 1024, %s177, [#allocation6], 64, 64, 4
        $region16: #{tpu_custom_call.1} parent=11 // pred_fallthru
          _
        // Predicated region
        $region17: #{tpu_custom_call.1} parent=11 // pred_check
          %p183 = pneg %p86
        $region18: #{tpu_custom_call.1} parent=11 // pred_check_branch
          %185 = sbr.rel (%p183) target = $region20
        $region19: #{tpu_custom_call.1} parent=11 // pred_region
          _
        $region20: #{tpu_custom_call.1} parent=11 // pred_fallthru
          _
        // Predicated region
        $region21: #{tpu_custom_call.1} parent=11 // pred_check
          %p186 = pneg %p107
        $region22: #{tpu_custom_call.1} parent=11 // pred_check_branch
          %188 = sbr.rel (%p186) target = $region24
        $region23: #{tpu_custom_call.1} parent=11 // pred_region
          %190 = vsyncadd [#allocation6], 0
          %s191 = sshll.u32 %s3, 4
          %s192 = int_to_ptr.hbm [resolvable:$true] %s191
          %s193 = sshll.u32 [#allocation7], 4
          %s194 = int_to_ptr.vmem [resolvable:$true] %s193
          %199 = dma.hbm_to_vmem [thread:$0]  %s192, 1024, %s194, [#allocation6], 64, 64, 4
        $region24: #{tpu_custom_call.1} parent=11 // pred_fallthru
          _
        // Predicated region
        $region25: #{tpu_custom_call.1} parent=11 // pred_check
          %p200 = pneg %p128
        $region26: #{tpu_custom_call.1} parent=11 // pred_check_branch
          %202 = sbr.rel (%p200) target = $region28
        $region27: #{tpu_custom_call.1} parent=11 // pred_region
          _
        $region28: #{tpu_custom_call.1} parent=11 // pred_fallthru
          _
      $region12: #{tpu_custom_call.1} parent=5 // pred_fallthru
        _
      %p203 = scmp.lt.s32.totalorder %s18, 2
      // Predicated region
      $region29: #{tpu_custom_call.1} parent=5 // pred_check
        %p204 = pneg %p203
      $region30: #{tpu_custom_call.1} parent=5 // pred_check_branch
        %206 = sbr.rel (%p204) target = $region32
      $region31: #{tpu_custom_call.1} parent=5 // pred_region
        // Predicated region
        $region33: #{tpu_custom_call.1} parent=31 // pred_check
          %p207 = pneg %p38
        $region34: #{tpu_custom_call.1} parent=31 // pred_check_branch
          %209 = sbr.rel (%p207) target = $region36
        $region35: #{tpu_custom_call.1} parent=31 // pred_region
          %s210 = sand.u32 %s28, 1
          %s211 = scalar_lea.sflag [#allocation3], %s210
          %s212 = sand.u32 %s28, 1
          %s213 = smul.addr %s212, 8
          %s214 = scalar_lea.vmem [#allocation2], %s213
          %216 = vsyncadd %s211, 0
          %s217 = smul.addr %s18, 8
          %s218 = scalar_lea.hbm %s0, %s217
          %s220 = sshll.u32 %s218, 4
          %s221 = int_to_ptr.hbm [resolvable:$true] %s220
          %s222 = sshll.u32 %s214, 4
          %s223 = int_to_ptr.vmem [resolvable:$true] %s222
          %225 = dma.hbm_to_vmem [thread:$0]  %s221, 128, %s223, %s211
        $region36: #{tpu_custom_call.1} parent=31 // pred_fallthru
          _
      $region32: #{tpu_custom_call.1} parent=5 // pred_fallthru
        _
      %p226 = scmp.le.s32.totalorder 1, %s18
      %p227 = scmp.lt.s32.totalorder %s18, 3
      %p228 = pnand %p226, %p227
      %p229 = pneg %p228
      // Predicated region
      $region37: #{tpu_custom_call.1} parent=5 // pred_check
        _
      $region38: #{tpu_custom_call.1} parent=5 // pred_check_branch
        %231 = sbr.rel (%p228) target = $region40
      $region39: #{tpu_custom_call.1} parent=5 // pred_region
        %s232 = ssub.s32 %s18, 1
        %s233 = sand.u32 %s31, 1
        %s234 = scalar_lea.sflag [#allocation3], %s233
        %s235 = sand.u32 %s31, 1
        %s236 = smul.addr %s235, 8
        %s237 = scalar_lea.vmem [#allocation2], %s236
        // Predicated region
        $region41: #{tpu_custom_call.1} parent=39 // pred_check
          %p238 = pneg %p44
        $region42: #{tpu_custom_call.1} parent=39 // pred_check_branch
          %240 = sbr.rel (%p238) target = $region44
        $region43: #{tpu_custom_call.1} parent=39 // pred_region
          %242 = dma.done %s234, 128
        $region44: #{tpu_custom_call.1} parent=39 // pred_fallthru
          _
        // Predicated region
        $region45: #{tpu_custom_call.1} parent=39 // pred_check
          %p243 = pneg %p65
        $region46: #{tpu_custom_call.1} parent=39 // pred_check_branch
          %245 = sbr.rel (%p243) target = $region48
        $region47: #{tpu_custom_call.1} parent=39 // pred_region
          %247 = dma.done [#allocation6], 1024
        $region48: #{tpu_custom_call.1} parent=39 // pred_fallthru
          _
        // Predicated region
        $region49: #{tpu_custom_call.1} parent=39 // pred_check
          %p248 = pneg %p107
        $region50: #{tpu_custom_call.1} parent=39 // pred_check_branch
          %250 = sbr.rel (%p248) target = $region52
        $region51: #{tpu_custom_call.1} parent=39 // pred_region
          %252 = dma.done [#allocation6], 1024
        $region52: #{tpu_custom_call.1} parent=39 // pred_fallthru
          _
        %s253 = sand.u32 %s31, 1
        %s254 = scalar_lea.sflag [#allocation3], %s253
        %s255 = sand.u32 %s31, 1
        %s256 = smul.addr %s255, 8
        %s257 = scalar_lea.vmem [#allocation2], %s256
        %p258 = pneg %p44
        %p259 = pneg %p41
        %p260 = pneg %p65
        %p261 = pneg %p62
        %p262 = pneg %p86
        %p263 = pneg %p83
        %p264 = pneg %p107
        %p265 = pneg %p104
        %p266 = pneg %p128
        %p267 = pneg %p125
        %p268 = pneg %p154
        %p269 = pneg %p151
        %s270 = sand.u32 %s141, 1
        %s271 = scalar_lea.sflag [#allocation4], %s270
        %s272 = sand.u32 %s141, 1
        %s273 = smul.addr %s272, 8
        %s274 = scalar_lea.vmem [#allocation8], %s273
        %v275 = vld [vmem:[%s237] sm:$0xff]
        %v276 = vpack.c.bf16 %v275, %v275
        %v277 = vld [vmem:[#allocation5] sm:$0xf]
        %v278 = vld [vmem:[#allocation5 + $0x4] sm:$0xf]
        %v279 = vld [vmem:[#allocation5 + $0x8] sm:$0xf]
        %v280 = vld [vmem:[#allocation5 + $0xc] sm:$0xf]
        %v281 = vld [vmem:[#allocation5 + $0x10] sm:$0xf]
        %v282 = vld [vmem:[#allocation5 + $0x14] sm:$0xf]
        %v283 = vld [vmem:[#allocation5 + $0x18] sm:$0xf]
        %v284 = vld [vmem:[#allocation5 + $0x1c] sm:$0xf]
        %v285 = vld [vmem:[#allocation5 + $0x20] sm:$0xf]
        %v286 = vld [vmem:[#allocation5 + $0x24] sm:$0xf]
        %v287 = vld [vmem:[#allocation5 + $0x28] sm:$0xf]
        %v288 = vld [vmem:[#allocation5 + $0x2c] sm:$0xf]
        %v289 = vld [vmem:[#allocation5 + $0x30] sm:$0xf]
        %v290 = vld [vmem:[#allocation5 + $0x34] sm:$0xf]
        %v291 = vld [vmem:[#allocation5 + $0x38] sm:$0xf]
        %v292 = vld [vmem:[#allocation5 + $0x3c] sm:$0xf]
        %v293 = vld [vmem:[%s2] sm:$0x1]
        %v295 = vperm.slane %v293, 0
        %v313 = vunpack.c.l.b16 %v277
        %v314 = vunpack.c.l.b16 %v278
        %v315 = vunpack.c.l.b16 %v279
        %v316 = vunpack.c.l.b16 %v280
        %v317 = vunpack.c.l.b16 %v281
        %v318 = vunpack.c.l.b16 %v282
        %v319 = vunpack.c.l.b16 %v283
        %v320 = vunpack.c.l.b16 %v284
        %v321 = vunpack.c.l.b16 %v285
        %v322 = vunpack.c.l.b16 %v286
        %v323 = vunpack.c.l.b16 %v287
        %v324 = vunpack.c.l.b16 %v288
        %v325 = vunpack.c.l.b16 %v289
        %v326 = vunpack.c.l.b16 %v290
        %v327 = vunpack.c.l.b16 %v291
        %v328 = vunpack.c.l.b16 %v292
        %v329 = vpack.c.b16 %v314, %v313
        %v330 = vpack.c.b16 %v316, %v315
        %v331 = vpack.c.b16 %v318, %v317
        %v332 = vpack.c.b16 %v320, %v319
        %v333 = vpack.c.b16 %v322, %v321
        %v334 = vpack.c.b16 %v324, %v323
        %v335 = vpack.c.b16 %v326, %v325
        %v336 = vpack.c.b16 %v328, %v327
        %345 = vmatpush.bf16.msra.mxu0 %v336
        %346 = vmatpush.bf16.msra.mxu0 %v335
        %347 = vmatpush.bf16.msra.mxu0 %v334
        %348 = vmatpush.bf16.msra.mxu0 %v333
        %349 = vmatpush.bf16.msra.mxu0 %v332
        %350 = vmatpush.bf16.msra.mxu0 %v331
        %351 = vmatpush.bf16.msra.mxu0 %v330
        %352 = vmatpush.bf16.msra.mxu0 %v329
        %353 = vmatmul.bf16.gmra.mxu0 %v276
        %v354 = vpop.f32.mrf.mxu0
        %v355 = vadd.f32 %v295, %v354
        %v356 = vpop.f32.mrf.mxu0
        %357 = vdwg.mxu0
        %v358 = vmax.f32 %v355, 0.0
        %v359 = vpack.c.bf16 %v358, %v358
        %v360 = vld [vmem:[#allocation7] sm:$0xf]
        %v361 = vld [vmem:[#allocation7 + $0x4] sm:$0xf]
        %v362 = vld [vmem:[#allocation7 + $0x8] sm:$0xf]
        %v363 = vld [vmem:[#allocation7 + $0xc] sm:$0xf]
        %v364 = vld [vmem:[#allocation7 + $0x10] sm:$0xf]
        %v365 = vld [vmem:[#allocation7 + $0x14] sm:$0xf]
        %v366 = vld [vmem:[#allocation7 + $0x18] sm:$0xf]
        %v367 = vld [vmem:[#allocation7 + $0x1c] sm:$0xf]
        %v368 = vld [vmem:[#allocation7 + $0x20] sm:$0xf]
        %v369 = vld [vmem:[#allocation7 + $0x24] sm:$0xf]
        %v370 = vld [vmem:[#allocation7 + $0x28] sm:$0xf]
        %v371 = vld [vmem:[#allocation7 + $0x2c] sm:$0xf]
        %v372 = vld [vmem:[#allocation7 + $0x30] sm:$0xf]
        %v373 = vld [vmem:[#allocation7 + $0x34] sm:$0xf]
        %v374 = vld [vmem:[#allocation7 + $0x38] sm:$0xf]
        %v375 = vld [vmem:[#allocation7 + $0x3c] sm:$0xf]
        %v392 = vunpack.c.l.b16 %v360
        %v393 = vunpack.c.l.b16 %v361
        %v394 = vunpack.c.l.b16 %v362
        %v395 = vunpack.c.l.b16 %v363
        %v396 = vunpack.c.l.b16 %v364
        %v397 = vunpack.c.l.b16 %v365
        %v398 = vunpack.c.l.b16 %v366
        %v399 = vunpack.c.l.b16 %v367
        %v400 = vunpack.c.l.b16 %v368
        %v401 = vunpack.c.l.b16 %v369
        %v402 = vunpack.c.l.b16 %v370
        %v403 = vunpack.c.l.b16 %v371
        %v404 = vunpack.c.l.b16 %v372
        %v405 = vunpack.c.l.b16 %v373
        %v406 = vunpack.c.l.b16 %v374
        %v407 = vunpack.c.l.b16 %v375
        %v408 = vpack.c.b16 %v393, %v392
        %v409 = vpack.c.b16 %v395, %v394
        %v410 = vpack.c.b16 %v397, %v396
        %v411 = vpack.c.b16 %v399, %v398
        %v412 = vpack.c.b16 %v401, %v400
        %v413 = vpack.c.b16 %v403, %v402
        %v414 = vpack.c.b16 %v405, %v404
        %v415 = vpack.c.b16 %v407, %v406
        %424 = vmatpush.bf16.msra.mxu0 %v415
        %425 = vmatpush.bf16.msra.mxu0 %v414
        %426 = vmatpush.bf16.msra.mxu0 %v413
        %427 = vmatpush.bf16.msra.mxu0 %v412
        %428 = vmatpush.bf16.msra.mxu0 %v411
        %429 = vmatpush.bf16.msra.mxu0 %v410
        %430 = vmatpush.bf16.msra.mxu0 %v409
        %431 = vmatpush.bf16.msra.mxu0 %v408
        %432 = vmatmul.bf16.gmra.mxu0 %v359
        %v433 = vpop.f32.mrf.mxu0
        %v434 = vadd.f32 0.0, %v433
        %v435 = vpop.f32.mrf.mxu0
        %436 = vdwg.mxu0
        %v437 = vadd.f32 %v275, %v434
        %v438 = vld [vmem:[%s4] sm:$0x1]
        %v440 = vperm.slane %v438, 0
        %v442 = vadd.f32 %v437, %v440
        %443 = vst [vmem:[%s274] sm:$0xff] %v442
        %s444 = sand.u32 %s141, 1
        %s445 = scalar_lea.sflag [#allocation4], %s444
        %s446 = sand.u32 %s141, 1
        %s447 = smul.addr %s446, 8
        %s448 = scalar_lea.vmem [#allocation8], %s447
        // Predicated region
        $region53: #{tpu_custom_call.1} parent=39 // pred_check
          %p449 = pneg %p151
        $region54: #{tpu_custom_call.1} parent=39 // pred_check_branch
          %451 = sbr.rel (%p449) target = $region56
        $region55: #{tpu_custom_call.1} parent=39 // pred_region
          %453 = vsyncadd %s445, 0
          %s454 = smul.addr %s23, 8
          %s455 = scalar_lea.hbm %s5, %s454
          %s457 = sshll.u32 %s448, 4
          %s458 = int_to_ptr.vmem [resolvable:$true] %s457
          %s459 = sshll.u32 %s455, 4
          %s460 = int_to_ptr.hbm [resolvable:$true] %s459
          %462 = dma.vmem_to_hbm [thread:$0]  %s458, 128, %s460, %s445
        $region56: #{tpu_custom_call.1} parent=39 // pred_fallthru
          _
      $region40: #{tpu_custom_call.1} parent=5 // pred_fallthru
        _
      %p463 = scmp.le.s32.totalorder 2, %s18
      // Predicated region
      $region57: #{tpu_custom_call.1} parent=5 // pred_check
        %p464 = pneg %p463
      $region58: #{tpu_custom_call.1} parent=5 // pred_check_branch
        %466 = sbr.rel (%p464) target = $region60
      $region59: #{tpu_custom_call.1} parent=5 // pred_region
        %s467 = ssub.s32 %s18, 2
        // Predicated region
        $region61: #{tpu_custom_call.1} parent=59 // pred_check
          %p468 = pneg %p157
        $region62: #{tpu_custom_call.1} parent=59 // pred_check_branch
          %470 = sbr.rel (%p468) target = $region64
        $region63: #{tpu_custom_call.1} parent=59 // pred_region
          %s471 = sand.u32 %s142, 1
          %s472 = scalar_lea.sflag [#allocation4], %s471
          %s473 = sand.u32 %s142, 1
          %s474 = smul.addr %s473, 8
          %s475 = scalar_lea.vmem [#allocation8], %s474
          %477 = dma.done %s472, 128
        $region64: #{tpu_custom_call.1} parent=59 // pred_fallthru
          _
      $region60: #{tpu_custom_call.1} parent=5 // pred_fallthru
        _
    $region6: #{tpu_custom_call.1} parent=1 // loop_footer
      %s22 = sadd.s32 1, %s18
    $region7: #{tpu_custom_call.1} parent=1 // loop_footer_branch
      %17 = sbr.rel target = $region3
    $region8: #{tpu_custom_call.1} parent=1 // loop_exit
      _
    %478 = vsyncpa [#allocation3], 1
    %s479 = scalar_lea.sflag [#allocation3], 1
    %480 = vsyncpa %s479, 1
    %481 = vsyncpa [#allocation6], 1
    %482 = vsyncpa [#allocation4], 1
    %s483 = scalar_lea.sflag [#allocation4], 1
    %484 = vsyncpa %s483, 1

// kernel: tpu_custom_call.1
$region0: #{tpu_custom_call.1}
  #allocation0 [shape = 'u32[]', space=smem, size = 0x4, offset = 0x4, fixed_abs, tag = 'smem constant byte address 0x4 - core index']
  #allocation1 [shape = 'u32[72,128]{1,0:T(1,128)}', space=vmem, size = 0x9000, scoped, tag = 'internal scratch']
  %s0 = inlined_call_operand.hbm [shape: f32[16,128], index: 0, kind: input, shape index: {}]
  %s1 = inlined_call_operand.hbm [shape: bf16[128,128], index: 1, kind: input, shape index: {}]
  %s2 = inlined_call_operand.vmem [shape: f32[1,128], index: 2, kind: input, shape index: {}]
  %s3 = inlined_call_operand.hbm [shape: bf16[128,128], index: 3, kind: input, shape index: {}]
  %s4 = inlined_call_operand.vmem [shape: f32[1,128], index: 4, kind: input, shape index: {}]
  %s5 = inlined_call_operand.hbm [shape: f32[16,128], index: 5, kind: output, shape index: {}]
  %s6 = sld [smem:[#allocation0]]
  $region65: #{tpu_custom_call.1} parent=0
    _
  %s8 = ssub.s32 1, %s6
  %s9 = scalar_select 0, %s8, %s6
  $region1: #{tpu_custom_call.1} parent=0
    #allocation2 [shape = 'u8[8192]{0}', space=vmem, size = 0x2000, scoped, tag = 'input window, operand 0']
    #allocation3 [shape = 's32[2]{0}', space=sflag, size = 0x8, scoped, tag = 'scoped memory for tpu_custom_call.1']
    #allocation4 [shape = 's32[2]{0}', space=sflag, size = 0x8, scoped, tag = 'scoped memory for tpu_custom_call.1']
    #allocation5 [shape = 'u8[32768]{0}', space=vmem, size = 0x8000, scoped, tag = 'input window, operand 1, single buffered']
    #allocation6 [shape = 's32[1]{0}', space=sflag, size = 0x4, scoped, tag = 'scoped memory for tpu_custom_call.1']
    #allocation7 [shape = 'u8[32768]{0}', space=vmem, size = 0x8000, scoped, tag = 'input window, operand 3, single buffered']
    #allocation8 [shape = 'u8[8192]{0}', space=vmem, size = 0x2000, scoped, tag = 'output window, operand 0']
    %10 = vsyncpa [#allocation3], 0
    %s11 = scalar_lea.sflag [#allocation3], 1
    %12 = vsyncpa %s11, 0
    %13 = vsyncpa [#allocation6], 0
    %14 = vsyncpa [#allocation4], 0
    %s15 = scalar_lea.sflag [#allocation4], 1
    %16 = vsyncpa %s15, 0
    loop: start=0, step=1, limit=4
    $region2: #{tpu_custom_call.1} parent=1 // loop_pre_header
      _
    $region3: #{tpu_custom_call.1} parent=1 // loop_header
      %s18 = sphi 0, %s22
      %p19 = scmp.ge.s32.totalorder %s18, 4
      %s28 = sphi 0, %s30
      %s31 = sphi 0, %s28
      %s32 = sphi 0, %s31
      %s48 = sphi 0, %s32
      %s52 = sphi 0, %s52
      %s54 = sphi 0, %s52
      %s55 = sphi 0, %s54
      %s69 = sphi 0, %s55
      %s73 = sphi 0, %s73
      %s75 = sphi 0, %s73
      %s76 = sphi 0, %s75
      %s90 = sphi 0, %s76
      %s94 = sphi 0, %s94
      %s96 = sphi 0, %s94
      %s97 = sphi 0, %s96
      %s111 = sphi 0, %s97
      %s115 = sphi 0, %s115
      %s117 = sphi 0, %s115
      %s118 = sphi 0, %s117
      %s132 = sphi 0, %s118
      %s138 = sphi 0, %s140
      %s141 = sphi 0, %s138
      %s142 = sphi 0, %s141
      %s158 = sphi 0, %s142
    $region4: #{tpu_custom_call.1} parent=1 // loop_header_branch
      %21 = sbr.rel (%p19) target = $region8
    $region5: #{tpu_custom_call.1} parent=1 // loop_body
      %s23 = ssub.s32 %s18, 1
      %s24 = ssub.s32 %s18, 2
      %s25 = sadd.s32 %s18, 1
      %s26 = ssub.s32 %s18, %s25
      %p27 = scmp.eq.s32.totalorder %s26, 0
      %s29 = sadd.s32 %s28, 1
      %s30 = scalar_select %p27, %s28, %s29
      %p33 = pneg %p27
      %p34 = scmp.eq.s32.totalorder %s18, 1
      %p35 = por %p33, %p34
      %p36 = scmp.ne.s32.totalorder %s28, %s31
      %p37 = scmp.eq.s32.totalorder %s18, 0
      %p38 = por %p36, %p37
      %p39 = scmp.ne.s32.totalorder %s28, %s31
      %p40 = scmp.eq.s32.totalorder %s23, 1
      %p41 = por %p39, %p40
      %p42 = scmp.ne.s32.totalorder %s31, %s32
      %p43 = scmp.eq.s32.totalorder %s23, 0
      %p44 = por %p42, %p43
      %p45 = scmp.ne.s32.totalorder %s31, %s32
      %p46 = scmp.eq.s32.totalorder %s24, 1
      %p47 = por %p45, %p46
      %p49 = scmp.ne.s32.totalorder %s32, %s48
      %p50 = scmp.eq.s32.totalorder %s24, 0
      %p51 = por %p49, %p50
      %s53 = sadd.s32 %s52, 1
      %p56 = scmp.eq.s32.totalorder %s18, 1
      %p57 = scmp.ne.s32.totalorder %s52, %s54
      %p58 = scmp.eq.s32.totalorder %s18, 0
      %p59 = por %p57, %p58
      %p60 = scmp.ne.s32.totalorder %s52, %s54
      %p61 = scmp.eq.s32.totalorder %s23, 1
      %p62 = por %p60, %p61
      %p63 = scmp.ne.s32.totalorder %s54, %s55
      %p64 = scmp.eq.s32.totalorder %s23, 0
      %p65 = por %p63, %p64
      %p66 = scmp.ne.s32.totalorder %s54, %s55
      %p67 = scmp.eq.s32.totalorder %s24, 1
      %p68 = por %p66, %p67
      %p70 = scmp.ne.s32.totalorder %s55, %s69
      %p71 = scmp.eq.s32.totalorder %s24, 0
      %p72 = por %p70, %p71
      %s74 = sadd.s32 %s73, 1
      %p77 = scmp.eq.s32.totalorder %s18, 1
      %p78 = scmp.ne.s32.totalorder %s73, %s75
      %p79 = scmp.eq.s32.totalorder %s18, 0
      %p80 = por %p78, %p79
      %p81 = scmp.ne.s32.totalorder %s73, %s75
      %p82 = scmp.eq.s32.totalorder %s23, 1
      %p83 = por %p81, %p82
      %p84 = scmp.ne.s32.totalorder %s75, %s76
      %p85 = scmp.eq.s32.totalorder %s23, 0
      %p86 = por %p84, %p85
      %p87 = scmp.ne.s32.totalorder %s75, %s76
      %p88 = scmp.eq.s32.totalorder %s24, 1
      %p89 = por %p87, %p88
      %p91 = scmp.ne.s32.totalorder %s76, %s90
      %p92 = scmp.eq.s32.totalorder %s24, 0
      %p93 = por %p91, %p92
      %s95 = sadd.s32 %s94, 1
      %p98 = scmp.eq.s32.totalorder %s18, 1
      %p99 = scmp.ne.s32.totalorder %s94, %s96
      %p100 = scmp.eq.s32.totalorder %s18, 0
      %p101 = por %p99, %p100
      %p102 = scmp.ne.s32.totalorder %s94, %s96
      %p103 = scmp.eq.s32.totalorder %s23, 1
      %p104 = por %p102, %p103
      %p105 = scmp.ne.s32.totalorder %s96, %s97
      %p106 = scmp.eq.s32.totalorder %s23, 0
      %p107 = por %p105, %p106
      %p108 = scmp.ne.s32.totalorder %s96, %s97
      %p109 = scmp.eq.s32.totalorder %s24, 1
      %p110 = por %p108, %p109
      %p112 = scmp.ne.s32.totalorder %s97, %s111
      %p113 = scmp.eq.s32.totalorder %s24, 0
      %p114 = por %p112, %p113
      %s116 = sadd.s32 %s115, 1
      %p119 = scmp.eq.s32.totalorder %s18, 1
      %p120 = scmp.ne.s32.totalorder %s115, %s117
      %p121 = scmp.eq.s32.totalorder %s18, 0
      %p122 = por %p120, %p121
      %p123 = scmp.ne.s32.totalorder %s115, %s117
      %p124 = scmp.eq.s32.totalorder %s23, 1
      %p125 = por %p123, %p124
      %p126 = scmp.ne.s32.totalorder %s117, %s118
      %p127 = scmp.eq.s32.totalorder %s23, 0
      %p128 = por %p126, %p127
      %p129 = scmp.ne.s32.totalorder %s117, %s118
      %p130 = scmp.eq.s32.totalorder %s24, 1
      %p131 = por %p129, %p130
      %p133 = scmp.ne.s32.totalorder %s118, %s132
      %p134 = scmp.eq.s32.totalorder %s24, 0
      %p135 = por %p133, %p134
      %s136 = ssub.s32 %s18, %s25
      %p137 = scmp.eq.s32.totalorder %s136, 0
      %s139 = sadd.s32 %s138, 1
      %s140 = scalar_select %p137, %s138, %s139
      %p143 = pneg %p137
      %p144 = scmp.eq.s32.totalorder %s18, 1
      %p145 = por %p143, %p144
      %p146 = scmp.ne.s32.totalorder %s138, %s141
      %p147 = scmp.eq.s32.totalorder %s18, 0
      %p148 = por %p146, %p147
      %p149 = scmp.ne.s32.totalorder %s138, %s141
      %p150 = scmp.eq.s32.totalorder %s23, 1
      %p151 = por %p149, %p150
      %p152 = scmp.ne.s32.totalorder %s141, %s142
      %p153 = scmp.eq.s32.totalorder %s23, 0
      %p154 = por %p152, %p153
      %p155 = scmp.ne.s32.totalorder %s141, %s142
      %p156 = scmp.eq.s32.totalorder %s24, 1
      %p157 = por %p155, %p156
      %p159 = scmp.ne.s32.totalorder %s142, %s158
      %p160 = scmp.eq.s32.totalorder %s24, 0
      %p161 = por %p159, %p160
      %p162 = scmp.le.s32.totalorder 1, %s18
      %p163 = scmp.lt.s32.totalorder %s18, 3
      %p164 = pnand %p162, %p163
      %p165 = pneg %p164
      // Predicated region
      $region9: #{tpu_custom_call.1} parent=5 // pred_check
        _
      $region10: #{tpu_custom_call.1} parent=5 // pred_check_branch
        %167 = sbr.rel (%p164) target = $region12
      $region11: #{tpu_custom_call.1} parent=5 // pred_region
        %s168 = ssub.s32 %s18, 1
        // Predicated region
        $region13: #{tpu_custom_call.1} parent=11 // pred_check
          %p169 = pneg %p65
        $region14: #{tpu_custom_call.1} parent=11 // pred_check_branch
          %171 = sbr.rel (%p169) target = $region16
        $region15: #{tpu_custom_call.1} parent=11 // pred_region
          %173 = vsyncadd [#allocation6], 0
          %s174 = sshll.u32 %s1, 4
          %s175 = int_to_ptr.hbm [resolvable:$true] %s174
          %s176 = sshll.u32 [#allocation5], 4
          %s177 = int_to_ptr.vmem [resolvable:$true] %s176
          %182 = dma.hbm_to_vmem [thread:$0]  %s175, 1024, %s177, [#allocation6], 64, 64, 4
        $region16: #{tpu_custom_call.1} parent=11 // pred_fallthru
          _
        // Predicated region
        $region17: #{tpu_custom_call.1} parent=11 // pred_check
          %p183 = pneg %p86
        $region18: #{tpu_custom_call.1} parent=11 // pred_check_branch
          %185 = sbr.rel (%p183) target = $region20
        $region19: #{tpu_custom_call.1} parent=11 // pred_region
          _
        $region20: #{tpu_custom_call.1} parent=11 // pred_fallthru
          _
        // Predicated region
        $region21: #{tpu_custom_call.1} parent=11 // pred_check
          %p186 = pneg %p107
        $region22: #{tpu_custom_call.1} parent=11 // pred_check_branch
          %188 = sbr.rel (%p186) target = $region24
        $region23: #{tpu_custom_call.1} parent=11 // pred_region
          %190 = vsyncadd [#allocation6], 0
          %s191 = sshll.u32 %s3, 4
          %s192 = int_to_ptr.hbm [resolvable:$true] %s191
          %s193 = sshll.u32 [#allocation7], 4
          %s194 = int_to_ptr.vmem [resolvable:$true] %s193
          %199 = dma.hbm_to_vmem [thread:$0]  %s192, 1024, %s194, [#allocation6], 64, 64, 4
        $region24: #{tpu_custom_call.1} parent=11 // pred_fallthru
          _
        // Predicated region
        $region25: #{tpu_custom_call.1} parent=11 // pred_check
          %p200 = pneg %p128
        $region26: #{tpu_custom_call.1} parent=11 // pred_check_branch
          %202 = sbr.rel (%p200) target = $region28
        $region27: #{tpu_custom_call.1} parent=11 // pred_region
          _
        $region28: #{tpu_custom_call.1} parent=11 // pred_fallthru
          _
      $region12: #{tpu_custom_call.1} parent=5 // pred_fallthru
        _
      %p203 = scmp.lt.s32.totalorder %s18, 2
      // Predicated region
      $region29: #{tpu_custom_call.1} parent=5 // pred_check
        %p204 = pneg %p203
      $region30: #{tpu_custom_call.1} parent=5 // pred_check_branch
        %206 = sbr.rel (%p204) target = $region32
      $region31: #{tpu_custom_call.1} parent=5 // pred_region
        // Predicated region
        $region33: #{tpu_custom_call.1} parent=31 // pred_check
          %p207 = pneg %p38
        $region34: #{tpu_custom_call.1} parent=31 // pred_check_branch
          %209 = sbr.rel (%p207) target = $region36
        $region35: #{tpu_custom_call.1} parent=31 // pred_region
          %s210 = sand.u32 %s28, 1
          %s211 = scalar_lea.sflag [#allocation3], %s210
          %s212 = sand.u32 %s28, 1
          %s213 = smul.addr %s212, 8
          %s214 = scalar_lea.vmem [#allocation2], %s213
          %216 = vsyncadd %s211, 0
          %s217 = smul.addr %s18, 8
          %s218 = scalar_lea.hbm %s0, %s217
          %s220 = sshll.u32 %s218, 4
          %s221 = int_to_ptr.hbm [resolvable:$true] %s220
          %s222 = sshll.u32 %s214, 4
          %s223 = int_to_ptr.vmem [resolvable:$true] %s222
          %225 = dma.hbm_to_vmem [thread:$0]  %s221, 128, %s223, %s211
        $region36: #{tpu_custom_call.1} parent=31 // pred_fallthru
          _
      $region32: #{tpu_custom_call.1} parent=5 // pred_fallthru
        _
      %p226 = scmp.le.s32.totalorder 1, %s18
      %p227 = scmp.lt.s32.totalorder %s18, 3
      %p228 = pnand %p226, %p227
      %p229 = pneg %p228
      // Predicated region
      $region37: #{tpu_custom_call.1} parent=5 // pred_check
        _
      $region38: #{tpu_custom_call.1} parent=5 // pred_check_branch
        %231 = sbr.rel (%p228) target = $region40
      $region39: #{tpu_custom_call.1} parent=5 // pred_region
        %s232 = ssub.s32 %s18, 1
        %s233 = sand.u32 %s31, 1
        %s234 = scalar_lea.sflag [#allocation3], %s233
        %s235 = sand.u32 %s31, 1
        %s236 = smul.addr %s235, 8
        %s237 = scalar_lea.vmem [#allocation2], %s236
        // Predicated region
        $region41: #{tpu_custom_call.1} parent=39 // pred_check
          %p238 = pneg %p44
        $region42: #{tpu_custom_call.1} parent=39 // pred_check_branch
          %240 = sbr.rel (%p238) target = $region44
        $region43: #{tpu_custom_call.1} parent=39 // pred_region
          %242 = dma.done %s234, 128
        $region44: #{tpu_custom_call.1} parent=39 // pred_fallthru
          _
        // Predicated region
        $region45: #{tpu_custom_call.1} parent=39 // pred_check
          %p243 = pneg %p65
        $region46: #{tpu_custom_call.1} parent=39 // pred_check_branch
          %245 = sbr.rel (%p243) target = $region48
        $region47: #{tpu_custom_call.1} parent=39 // pred_region
          %247 = dma.done [#allocation6], 1024
        $region48: #{tpu_custom_call.1} parent=39 // pred_fallthru
          _
        // Predicated region
        $region49: #{tpu_custom_call.1} parent=39 // pred_check
          %p248 = pneg %p107
        $region50: #{tpu_custom_call.1} parent=39 // pred_check_branch
          %250 = sbr.rel (%p248) target = $region52
        $region51: #{tpu_custom_call.1} parent=39 // pred_region
          %252 = dma.done [#allocation6], 1024
        $region52: #{tpu_custom_call.1} parent=39 // pred_fallthru
          _
        %s253 = sand.u32 %s31, 1
        %s254 = scalar_lea.sflag [#allocation3], %s253
        %s255 = sand.u32 %s31, 1
        %s256 = smul.addr %s255, 8
        %s257 = scalar_lea.vmem [#allocation2], %s256
        %p258 = pneg %p44
        %p259 = pneg %p41
        %p260 = pneg %p65
        %p261 = pneg %p62
        %p262 = pneg %p86
        %p263 = pneg %p83
        %p264 = pneg %p107
        %p265 = pneg %p104
        %p266 = pneg %p128
        %p267 = pneg %p125
        %p268 = pneg %p154
        %p269 = pneg %p151
        %s270 = sand.u32 %s141, 1
        %s271 = scalar_lea.sflag [#allocation4], %s270
        %s272 = sand.u32 %s141, 1
        %s273 = smul.addr %s272, 8
        %s274 = scalar_lea.vmem [#allocation8], %s273
        %v275 = vld [vmem:[%s237] sm:$0xff]
        %v276 = vpack.c.bf16 %v275, %v275
        %v277 = vld [vmem:[#allocation5] sm:$0xf]
        %v278 = vld [vmem:[#allocation5 + $0x4] sm:$0xf]
        %v279 = vld [vmem:[#allocation5 + $0x8] sm:$0xf]
        %v280 = vld [vmem:[#allocation5 + $0xc] sm:$0xf]
        %v281 = vld [vmem:[#allocation5 + $0x10] sm:$0xf]
        %v282 = vld [vmem:[#allocation5 + $0x14] sm:$0xf]
        %v283 = vld [vmem:[#allocation5 + $0x18] sm:$0xf]
        %v284 = vld [vmem:[#allocation5 + $0x1c] sm:$0xf]
        %v285 = vld [vmem:[#allocation5 + $0x20] sm:$0xf]
        %v286 = vld [vmem:[#allocation5 + $0x24] sm:$0xf]
        %v287 = vld [vmem:[#allocation5 + $0x28] sm:$0xf]
        %v288 = vld [vmem:[#allocation5 + $0x2c] sm:$0xf]
        %v289 = vld [vmem:[#allocation5 + $0x30] sm:$0xf]
        %v290 = vld [vmem:[#allocation5 + $0x34] sm:$0xf]
        %v291 = vld [vmem:[#allocation5 + $0x38] sm:$0xf]
        %v292 = vld [vmem:[#allocation5 + $0x3c] sm:$0xf]
        %v293 = vld [vmem:[%s2] sm:$0x1]
        %v295 = vperm.slane %v293, 0
        %v313 = vunpack.c.l.b16 %v277
        %v314 = vunpack.c.l.b16 %v278
        %v315 = vunpack.c.l.b16 %v279
        %v316 = vunpack.c.l.b16 %v280
        %v317 = vunpack.c.l.b16 %v281
        %v318 = vunpack.c.l.b16 %v282
        %v319 = vunpack.c.l.b16 %v283
        %v320 = vunpack.c.l.b16 %v284
        %v321 = vunpack.c.l.b16 %v285
        %v322 = vunpack.c.l.b16 %v286
        %v323 = vunpack.c.l.b16 %v287
        %v324 = vunpack.c.l.b16 %v288
        %v325 = vunpack.c.l.b16 %v289
        %v326 = vunpack.c.l.b16 %v290
        %v327 = vunpack.c.l.b16 %v291
        %v328 = vunpack.c.l.b16 %v292
        %v329 = vpack.c.b16 %v314, %v313
        %v330 = vpack.c.b16 %v316, %v315
        %v331 = vpack.c.b16 %v318, %v317
        %v332 = vpack.c.b16 %v320, %v319
        %v333 = vpack.c.b16 %v322, %v321
        %v334 = vpack.c.b16 %v324, %v323
        %v335 = vpack.c.b16 %v326, %v325
        %v336 = vpack.c.b16 %v328, %v327
        %345 = vmatpush.bf16.msra.mxu0 %v336
        %346 = vmatpush.bf16.msra.mxu0 %v335
        %347 = vmatpush.bf16.msra.mxu0 %v334
        %348 = vmatpush.bf16.msra.mxu0 %v333
        %349 = vmatpush.bf16.msra.mxu0 %v332
        %350 = vmatpush.bf16.msra.mxu0 %v331
        %351 = vmatpush.bf16.msra.mxu0 %v330
        %352 = vmatpush.bf16.msra.mxu0 %v329
        %353 = vmatmul.bf16.gmra.mxu0 %v276
        %v354 = vpop.f32.mrf.mxu0
        %v355 = vadd.f32 %v295, %v354
        %v356 = vpop.f32.mrf.mxu0
        %357 = vdwg.mxu0
        %v358 = vmax.f32 %v355, 0.0
        %v359 = vpack.c.bf16 %v358, %v358
        %v360 = vld [vmem:[#allocation7] sm:$0xf]
        %v361 = vld [vmem:[#allocation7 + $0x4] sm:$0xf]
        %v362 = vld [vmem:[#allocation7 + $0x8] sm:$0xf]
        %v363 = vld [vmem:[#allocation7 + $0xc] sm:$0xf]
        %v364 = vld [vmem:[#allocation7 + $0x10] sm:$0xf]
        %v365 = vld [vmem:[#allocation7 + $0x14] sm:$0xf]
        %v366 = vld [vmem:[#allocation7 + $0x18] sm:$0xf]
        %v367 = vld [vmem:[#allocation7 + $0x1c] sm:$0xf]
        %v368 = vld [vmem:[#allocation7 + $0x20] sm:$0xf]
        %v369 = vld [vmem:[#allocation7 + $0x24] sm:$0xf]
        %v370 = vld [vmem:[#allocation7 + $0x28] sm:$0xf]
        %v371 = vld [vmem:[#allocation7 + $0x2c] sm:$0xf]
        %v372 = vld [vmem:[#allocation7 + $0x30] sm:$0xf]
        %v373 = vld [vmem:[#allocation7 + $0x34] sm:$0xf]
        %v374 = vld [vmem:[#allocation7 + $0x38] sm:$0xf]
        %v375 = vld [vmem:[#allocation7 + $0x3c] sm:$0xf]
        %v392 = vunpack.c.l.b16 %v360
        %v393 = vunpack.c.l.b16 %v361
        %v394 = vunpack.c.l.b16 %v362
        %v395 = vunpack.c.l.b16 %v363
        %v396 = vunpack.c.l.b16 %v364
        %v397 = vunpack.c.l.b16 %v365
        %v398 = vunpack.c.l.b16 %v366
        %v399 = vunpack.c.l.b16 %v367
        %v400 = vunpack.c.l.b16 %v368
        %v401 = vunpack.c.l.b16 %v369
        %v402 = vunpack.c.l.b16 %v370
        %v403 = vunpack.c.l.b16 %v371
        %v404 = vunpack.c.l.b16 %v372
        %v405 = vunpack.c.l.b16 %v373
        %v406 = vunpack.c.l.b16 %v374
        %v407 = vunpack.c.l.b16 %v375
        %v408 = vpack.c.b16 %v393, %v392
        %v409 = vpack.c.b16 %v395, %v394
        %v410 = vpack.c.b16 %v397, %v396
        %v411 = vpack.c.b16 %v399, %v398
        %v412 = vpack.c.b16 %v401, %v400
        %v413 = vpack.c.b16 %v403, %v402
        %v414 = vpack.c.b16 %v405, %v404
        %v415 = vpack.c.b16 %v407, %v406
        %424 = vmatpush.bf16.msra.mxu0 %v415
        %425 = vmatpush.bf16.msra.mxu0 %v414
        %426 = vmatpush.bf16.msra.mxu0 %v413
        %427 = vmatpush.bf16.msra.mxu0 %v412
        %428 = vmatpush.bf16.msra.mxu0 %v411
        %429 = vmatpush.bf16.msra.mxu0 %v410
        %430 = vmatpush.bf16.msra.mxu0 %v409
        %431 = vmatpush.bf16.msra.mxu0 %v408
        %432 = vmatmul.bf16.gmra.mxu0 %v359
        %v433 = vpop.f32.mrf.mxu0
        %v434 = vadd.f32 0.0, %v433
        %v435 = vpop.f32.mrf.mxu0
        %436 = vdwg.mxu0
        %v437 = vadd.f32 %v275, %v434
        %v438 = vld [vmem:[%s4] sm:$0x1]
        %v440 = vperm.slane %v438, 0
        %v442 = vadd.f32 %v437, %v440
        %443 = vst [vmem:[%s274] sm:$0xff] %v442
        %s444 = sand.u32 %s141, 1
        %s445 = scalar_lea.sflag [#allocation4], %s444
        %s446 = sand.u32 %s141, 1
        %s447 = smul.addr %s446, 8
        %s448 = scalar_lea.vmem [#allocation8], %s447
        // Predicated region
        $region53: #{tpu_custom_call.1} parent=39 // pred_check
          %p449 = pneg %p151
        $region54: #{tpu_custom_call.1} parent=39 // pred_check_branch
          %451 = sbr.rel (%p449) target = $region56
        $region55: #{tpu_custom_call.1} parent=39 // pred_region
          %453 = vsyncadd %s445, 0
          %s454 = smul.addr %s23, 8
          %s455 = scalar_lea.hbm %s5, %s454
          %s457 = sshll.u32 %s448, 4
          %s458 = int_to_ptr.vmem [resolvable:$true] %s457
          %s459 = sshll.u32 %s455, 4
          %s460 = int_to_ptr.hbm [resolvable:$true] %s459
          %462 = dma.vmem_to_hbm [thread:$0]  %s458, 128, %s460, %s445
        $region56: #{tpu_custom_call.1} parent=39 // pred_fallthru
          _
      $region40: #{tpu_custom_call.1} parent=5 // pred_fallthru
        _
      %p463 = scmp.le.s32.totalorder 2, %s18
      // Predicated region
      $region57: #{tpu_custom_call.1} parent=5 // pred_check
        %p464 = pneg %p463
      $region58: #{tpu_custom_call.1} parent=5 // pred_check_branch
        %466 = sbr.rel (%p464) target = $region60
      $region59: #{tpu_custom_call.1} parent=5 // pred_region
        %s467 = ssub.s32 %s18, 2
        // Predicated region
        $region61: #{tpu_custom_call.1} parent=59 // pred_check
          %p468 = pneg %p157
        $region62: #{tpu_custom_call.1} parent=59 // pred_check_branch
          %470 = sbr.rel (%p468) target = $region64
        $region63: #{tpu_custom_call.1} parent=59 // pred_region
          %s471 = sand.u32 %s142, 1
          %s472 = scalar_lea.sflag [#allocation4], %s471
          %s473 = sand.u32 %s142, 1
          %s474 = smul.addr %s473, 8
          %s475 = scalar_lea.vmem [#allocation8], %s474
          %477 = dma.done %s472, 128
        $region64: #{tpu_custom_call.1} parent=59 // pred_fallthru
          _
      $region60: #{tpu_custom_call.1} parent=5 // pred_fallthru
        _
    $region6: #{tpu_custom_call.1} parent=1 // loop_footer
      %s22 = sadd.s32 1, %s18
    $region7: #{tpu_custom_call.1} parent=1 // loop_footer_branch
      %17 = sbr.rel target = $region3
    $region8: #{tpu_custom_call.1} parent=1 // loop_exit
      _
    %478 = vsyncpa [#allocation3], 1
    %s479 = scalar_lea.sflag [#allocation3], 1
    %480 = vsyncpa %s479, 1
    %481 = vsyncpa [#allocation6], 1
    %482 = vsyncpa [#allocation4], 1
    %s483 = scalar_lea.sflag [#allocation4], 1
    %484 = vsyncpa %s483, 1

</llo_original>
